<compile_context>
chip_gen: v6e
topology: v6e:2x2x1
jax: 0.10.0
libtpu: 0.0.40
codegen_flags: <defaults>
</compile_context>

<pallas_src>
import functools

import jax
import jax.numpy as jnp
import numpy as np
from jax import lax
from jax.experimental import pallas as pl
from jax.experimental.pallas import tpu as pltpu


_VMEM_LIMIT_BYTES = 32 * 1024 * 1024   # explicit scoped-VMEM limit; safe on v5e/v6e and v7x (64 MiB phys)
_VMEM_TILE_BUDGET = 16 * 1024 * 1024   # target per-grid-step working set (headroom for compiler temps)


def _round_up(x, m):
    return (x + m - 1) // m * m


def _pick_tile_m(n_steps, k_pad, c_pad, m_rows, in_itemsize, out_itemsize,
                 budget=_VMEM_TILE_BUDGET):
    """Largest row tile (multiple of 16 sublanes) whose per-step working set fits the VMEM budget."""
    m_full = _round_up(m_rows, 16)
    for cand in (2048, 1024, 512, 256, 128, 64, 32, 16):
        tm = min(cand, m_full)
        bytes_x = 2 * n_steps * tm * k_pad * in_itemsize     # input block, double-buffered
        bytes_o = 2 * n_steps * tm * c_pad * out_itemsize    # spike output block, double-buffered
        bytes_f32 = 4 * tm * c_pad * 4                       # f32 working set (y, v, spike, temps)
        bytes_misc = 2 * k_pad * c_pad * in_itemsize + 8 * c_pad * 4
        if bytes_x + bytes_o + bytes_f32 + bytes_misc <= budget:
            return tm
    return 16


def _bn_stats_kernel(x_ref, w_ref, sum_ref, sqsum_ref, *, n_steps):
    """Pass 1: accumulate per-channel sum / sum-of-squares of y = x @ W across all row tiles."""
    @pl.when(pl.program_id(0) == 0)
    def _init():
        sum_ref[...] = jnp.zeros_like(sum_ref)
        sqsum_ref[...] = jnp.zeros_like(sqsum_ref)

    w = w_ref[...]
    c_pad = w.shape[-1]
    s = jnp.zeros((1, c_pad), jnp.float32)
    sq = jnp.zeros((1, c_pad), jnp.float32)
    for t in range(n_steps):                                  # static unroll over time steps
        y = jnp.dot(x_ref[t, :, :], w, preferred_element_type=jnp.float32)
        s = s + jnp.sum(y, axis=0, keepdims=True)
        sq = sq + jnp.sum(y * y, axis=0, keepdims=True)
    sum_ref[...] += s
    sqsum_ref[...] += sq


def _bn_lif_kernel(x_ref, w_ref, scale_ref, shift_ref, out_ref, *,
                   n_steps, inv_tau, v_threshold):
    """Pass 2: per time step y = x_t @ W, fused BN (y*scale + shift), hard-reset LIF, bf16 spikes."""
    w = w_ref[...]
    scale = scale_ref[...]                                    # (1, Cp) — hoisted, broadcast once
    shift = shift_ref[...]
    tile_m = x_ref.shape[1]
    c_pad = w.shape[-1]
    v = jnp.zeros((tile_m, c_pad), jnp.float32)
    for t in range(n_steps):                                  # static unroll (T is small & static)
        y = jnp.dot(x_ref[t, :, :], w, preferred_element_type=jnp.float32)
        y = y * scale + shift
        v = v + (y - v) * inv_tau                             # charge (decay_input=True, v_reset=0)
        spike = (v >= v_threshold).astype(jnp.float32)
        out_ref[t, :, :] = spike.astype(out_ref.dtype)        # lane-dense (tile_m, Cp) store
        v = v * (1.0 - spike)                                 # hard reset to v_reset = 0


@functools.partial(jax.jit, static_argnames=("tau", "v_threshold", "eps", "tile_m",
                                             "matmul_dtype", "out_dtype"))
def spik_linear_layer(x, w_t, gamma, beta, *, tau=2.0, v_threshold=0.5, eps=1e-5,
                      tile_m=None, matmul_dtype=jnp.bfloat16, out_dtype=jnp.bfloat16):
    """x: (T, B, N, in_dim); w_t: (in_dim, out_dim) = nn.Linear weight transposed (no bias);
    gamma/beta: (out_dim,).  Returns {0,1} spikes (T, B, N, out_dim) in `out_dtype` (lossless)."""
    T, B, N, K = x.shape
    C = w_t.shape[1]
    M = B * N

    k_pad = _round_up(K, 128)                                 # lane-dense contraction dim
    c_pad = _round_up(C, 128)                                 # lane-dense channels (unmasked vst)
    in_item = jnp.dtype(matmul_dtype).itemsize
    out_item = jnp.dtype(out_dtype).itemsize
    if tile_m is None:
        tile_m = _pick_tile_m(T, k_pad, c_pad, M, in_item, out_item)
    tile_m = min(_round_up(tile_m, 16), _round_up(M, 16))
    m_pad = _round_up(max(M, tile_m), tile_m)
    nt = m_pad // tile_m

    # Zero-padding: padded rows/cols contribute exactly 0 to the matmul and to the BN sums.
    x3 = jnp.pad(x.reshape(T, M, K),
                 ((0, 0), (0, m_pad - M), (0, k_pad - K))).astype(matmul_dtype)
    wp = jnp.pad(w_t, ((0, k_pad - K), (0, c_pad - C))).astype(matmul_dtype)

    cparams_reduce = pltpu.CompilerParams(dimension_semantics=("arbitrary",),
                                          vmem_limit_bytes=_VMEM_LIMIT_BYTES)
    cparams_parallel = pltpu.CompilerParams(dimension_semantics=("parallel",),
                                            vmem_limit_bytes=_VMEM_LIMIT_BYTES)

    # ---- pass 1: per-channel batch statistics (training-mode BatchNorm1d) ----
    ch_sum, ch_sqsum = pl.pallas_call(
        functools.partial(_bn_stats_kernel, n_steps=T),
        out_shape=(jax.ShapeDtypeStruct((1, c_pad), jnp.float32),
                   jax.ShapeDtypeStruct((1, c_pad), jnp.float32)),
        grid=(nt,),
        in_specs=[pl.BlockSpec((T, tile_m, k_pad), lambda j: (0, j, 0)),
                  pl.BlockSpec((k_pad, c_pad), lambda j: (0, 0))],
        out_specs=(pl.BlockSpec((1, c_pad), lambda j: (0, 0)),
                   pl.BlockSpec((1, c_pad), lambda j: (0, 0))),
        compiler_params=cparams_reduce,
    )(x3, wp)

    # Fold BN (gamma, beta, mean, var) into a single per-channel scale/shift (tiny host-side math).
    count = float(T * M)                                      # true row count (padded rows add 0)
    mean = ch_sum / count                                     # (1, Cp)
    var = jnp.maximum(ch_sqsum / count - mean * mean, 0.0)    # biased variance, as BN normalization uses
    gamma_p = jnp.pad(gamma.astype(jnp.float32), (0, c_pad - C)).reshape(1, c_pad)
    beta_p = jnp.pad(beta.astype(jnp.float32), (0, c_pad - C)).reshape(1, c_pad)
    scale = gamma_p / jnp.sqrt(var + eps)
    shift = beta_p - mean * scale
    # TODO(synk): BatchNorm1d running_mean/running_var buffer updates (training-state side effect)
    # and the ATan surrogate gradient (backward-only) are not part of this forward-output kernel.

    # ---- pass 2: fused BN + multi-step LIF, tiled & pipelined over the B*N row axis ----
    spikes = pl.pallas_call(
        functools.partial(_bn_lif_kernel, n_steps=T, inv_tau=1.0 / float(tau),
                          v_threshold=float(v_threshold)),
        out_shape=jax.ShapeDtypeStruct((T, m_pad, c_pad), out_dtype),
        grid=(nt,),
        in_specs=[pl.BlockSpec((T, tile_m, k_pad), lambda j: (0, j, 0)),
                  pl.BlockSpec((k_pad, c_pad), lambda j: (0, 0)),
                  pl.BlockSpec((1, c_pad), lambda j: (0, 0)),
                  pl.BlockSpec((1, c_pad), lambda j: (0, 0))],
        out_specs=pl.BlockSpec((T, tile_m, c_pad), lambda j: (0, j, 0)),
        compiler_params=cparams_parallel,
    )(x3, wp, scale, shift)

    return spikes[:, :M, :C].reshape(T, B, N, C)


def spik_linear_layer_ref(x, w_t, gamma, beta, *, tau=2.0, v_threshold=0.5, eps=1e-5,
                          matmul_dtype=jnp.bfloat16):
    """Pure-JAX reference mirroring the PyTorch forward (training-mode BN, hard-reset LIF).
    Uses the same matmul input precision as the kernel (bf16 inputs, f32 accumulation)."""
    T, B, N, K = x.shape
    C = w_t.shape[1]
    y = jnp.dot(x.reshape(-1, K).astype(matmul_dtype), w_t.astype(matmul_dtype),
                preferred_element_type=jnp.float32)           # (T*B*N, C)
    mean = y.mean(axis=0)
    var = ((y - mean) ** 2).mean(axis=0)                      # biased, as BN uses for normalization
    y = (y - mean) / jnp.sqrt(var + eps) * gamma.astype(jnp.float32) + beta.astype(jnp.float32)
    y = y.reshape(T, B * N, C)

    def step(v, yt):
        v = v + (yt - v) / tau
        spike = (v >= v_threshold).astype(jnp.float32)
        return v * (1.0 - spike), spike

    _, spikes = lax.scan(step, jnp.zeros((B * N, C), jnp.float32), y)
    return spikes.reshape(T, B, N, C)


if __name__ == "__main__":
    # Small shapes implied by the forward: x is (T, B, N, in_dim).
    T, B, N, IN_DIM, OUT_DIM = 4, 2, 8, 16, 32

    key = jax.random.PRNGKey(0)
    kx, kw, kg, kb = jax.random.split(key, 4)

    x = jax.random.normal(kx, (T, B, N, IN_DIM), dtype=jnp.float32)
    # nn.Linear weight is (out_dim, in_dim); kernel takes its transpose. No bias (lif_bias=False).
    w = 0.2 * jax.random.normal(kw, (OUT_DIM, IN_DIM), dtype=jnp.float32)
    w_t = w.T
    gamma = 1.0 + 0.1 * jax.random.normal(kg, (OUT_DIM,), dtype=jnp.float32)
    beta = 0.1 * jax.random.normal(kb, (OUT_DIM,), dtype=jnp.float32)

    out = jax.block_until_ready(spik_linear_layer(x, w_t, gamma, beta))
    ref = jax.block_until_ready(spik_linear_layer_ref(x, w_t, gamma, beta))

    assert out.shape == (T, B, N, OUT_DIM)
    np.testing.assert_allclose(np.asarray(out).astype(np.float32), np.asarray(ref),
                               rtol=0, atol=1e-6)
    print("KERNEL_OK")
</pallas_src>

<mosaic_0001>
module attributes {stable_mosaic.version = 11 : i64} {
  func.func @_bn_stats_kernel(%arg0: i32, %arg1: memref<4x16x128xbf16, #tpu.memory_space<vmem>>, %arg2: memref<128x128xbf16, #tpu.memory_space<vmem>>, %arg3: memref<1x128xf32, #tpu.memory_space<vmem>>, %arg4: memref<1x128xf32, #tpu.memory_space<vmem>>) attributes {dimension_semantics = [#tpu.dimension_semantics<arbitrary>], iteration_bounds = array<i64: 1>, scalar_prefetch = 0 : i64, scratch_operands = 0 : i64, tpu.core_type = #tpu.core_type<tc>, window_params = [{transform_indices = @transform_0, window_bounds = array<i64: 4, 16, 128>}, {pipeline_mode = #tpu.pipeline_mode<synchronous>, transform_indices = @transform_1, window_bounds = array<i64: 128, 128>}, {pipeline_mode = #tpu.pipeline_mode<synchronous>, transform_indices = @transform_2, window_bounds = array<i64: 1, 128>}, {pipeline_mode = #tpu.pipeline_mode<synchronous>, transform_indices = @transform_3, window_bounds = array<i64: 1, 128>}]} {
    %c0_i32 = arith.constant 0 : i32
    %0 = arith.cmpi eq, %arg0, %c0_i32 : i32
    %1 = arith.extui %0 : i1 to i32
    %c0_i32_0 = arith.constant 0 : i32
    %2 = arith.cmpi ne, %1, %c0_i32_0 : i32
    scf.if %2 {
      %cst_32 = arith.constant 0.000000e+00 : f32
      %52 = vector.broadcast %cst_32 : f32 to vector<1x128xf32>
      %c0_33 = arith.constant 0 : index
      %c0_34 = arith.constant 0 : index
      %53 = vector.load %arg3[%c0_33, %c0_34] : memref<1x128xf32, #tpu.memory_space<vmem>>, vector<1x128xf32>
      tpu.vector_store %arg3[%c0_33, %c0_34], %52 {strides = array<i32>} : memref<1x128xf32, #tpu.memory_space<vmem>>, vector<1x128xf32>,
      %cst_35 = arith.constant 0.000000e+00 : f32
      %54 = vector.broadcast %cst_35 : f32 to vector<1x128xf32>
      %c0_36 = arith.constant 0 : index
      %c0_37 = arith.constant 0 : index
      %55 = vector.load %arg4[%c0_36, %c0_37] : memref<1x128xf32, #tpu.memory_space<vmem>>, vector<1x128xf32>
      tpu.vector_store %arg4[%c0_36, %c0_37], %54 {strides = array<i32>} : memref<1x128xf32, #tpu.memory_space<vmem>>, vector<1x128xf32>,
    } else {
    }
    %c0 = arith.constant 0 : index
    %c0_1 = arith.constant 0 : index
    %3 = vector.load %arg2[%c0, %c0_1] : memref<128x128xbf16, #tpu.memory_space<vmem>>, vector<128x128xbf16>
    %cst = arith.constant 0.000000e+00 : f32
    %4 = vector.broadcast %cst : f32 to vector<1x128xf32>
    %cst_2 = arith.constant 0.000000e+00 : f32
    %5 = vector.broadcast %cst_2 : f32 to vector<1x128xf32>
    %c0_3 = arith.constant 0 : index
    %c0_4 = arith.constant 0 : index
    %c0_5 = arith.constant 0 : index
    %6 = vector.load %arg1[%c0_3, %c0_4, %c0_5] : memref<4x16x128xbf16, #tpu.memory_space<vmem>>, vector<1x16x128xbf16>
    %7 = vector.shape_cast %6 : vector<1x16x128xbf16> to vector<16x128xbf16>
    %cst_6 = arith.constant dense<0.000000e+00> : vector<16x128xf32>
    %8 = tpu.matmul %7, %3, %cst_6 {dimension_numbers = #tpu.dot_dimension_numbers<[1], [0], [0], [1], [0, 0, 1, 1], [], []>} : vector<16x128xbf16>, vector<128x128xbf16>, vector<16x128xf32> -> vector<16x128xf32>
    %cst_7 = arith.constant dense<0.000000e+00> : vector<128xf32>
    %9 = vector.multi_reduction <add>, %8, %cst_7 [0] : vector<16x128xf32> to vector<128xf32>
    %10 = vector.shape_cast %9 : vector<128xf32> to vector<1x128xf32>
    %11 = arith.addf %4, %10 : vector<1x128xf32>
    %12 = arith.mulf %8, %8 : vector<16x128xf32>
    %cst_8 = arith.constant dense<0.000000e+00> : vector<128xf32>
    %13 = vector.multi_reduction <add>, %12, %cst_8 [0] : vector<16x128xf32> to vector<128xf32>
    %14 = vector.shape_cast %13 : vector<128xf32> to vector<1x128xf32>
    %15 = arith.addf %5, %14 : vector<1x128xf32>
    %c1 = arith.constant 1 : index
    %c0_9 = arith.constant 0 : index
    %c0_10 = arith.constant 0 : index
    %16 = vector.load %arg1[%c1, %c0_9, %c0_10] : memref<4x16x128xbf16, #tpu.memory_space<vmem>>, vector<1x16x128xbf16>
    %17 = vector.shape_cast %16 : vector<1x16x128xbf16> to vector<16x128xbf16>
    %cst_11 = arith.constant dense<0.000000e+00> : vector<16x128xf32>
    %18 = tpu.matmul %17, %3, %cst_11 {dimension_numbers = #tpu.dot_dimension_numbers<[1], [0], [0], [1], [0, 0, 1, 1], [], []>} : vector<16x128xbf16>, vector<128x128xbf16>, vector<16x128xf32> -> vector<16x128xf32>
    %cst_12 = arith.constant dense<0.000000e+00> : vector<128xf32>
    %19 = vector.multi_reduction <add>, %18, %cst_12 [0] : vector<16x128xf32> to vector<128xf32>
    %20 = vector.shape_cast %19 : vector<128xf32> to vector<1x128xf32>
    %21 = arith.addf %11, %20 : vector<1x128xf32>
    %22 = arith.mulf %18, %18 : vector<16x128xf32>
    %cst_13 = arith.constant dense<0.000000e+00> : vector<128xf32>
    %23 = vector.multi_reduction <add>, %22, %cst_13 [0] : vector<16x128xf32> to vector<128xf32>
    %24 = vector.shape_cast %23 : vector<128xf32> to vector<1x128xf32>
    %25 = arith.addf %15, %24 : vector<1x128xf32>
    %c2 = arith.constant 2 : index
    %c0_14 = arith.constant 0 : index
    %c0_15 = arith.constant 0 : index
    %26 = vector.load %arg1[%c2, %c0_14, %c0_15] : memref<4x16x128xbf16, #tpu.memory_space<vmem>>, vector<1x16x128xbf16>
    %27 = vector.shape_cast %26 : vector<1x16x128xbf16> to vector<16x128xbf16>
    %cst_16 = arith.constant dense<0.000000e+00> : vector<16x128xf32>
    %28 = tpu.matmul %27, %3, %cst_16 {dimension_numbers = #tpu.dot_dimension_numbers<[1], [0], [0], [1], [0, 0, 1, 1], [], []>} : vector<16x128xbf16>, vector<128x128xbf16>, vector<16x128xf32> -> vector<16x128xf32>
    %cst_17 = arith.constant dense<0.000000e+00> : vector<128xf32>
    %29 = vector.multi_reduction <add>, %28, %cst_17 [0] : vector<16x128xf32> to vector<128xf32>
    %30 = vector.shape_cast %29 : vector<128xf32> to vector<1x128xf32>
    %31 = arith.addf %21, %30 : vector<1x128xf32>
    %32 = arith.mulf %28, %28 : vector<16x128xf32>
    %cst_18 = arith.constant dense<0.000000e+00> : vector<128xf32>
    %33 = vector.multi_reduction <add>, %32, %cst_18 [0] : vector<16x128xf32> to vector<128xf32>
    %34 = vector.shape_cast %33 : vector<128xf32> to vector<1x128xf32>
    %35 = arith.addf %25, %34 : vector<1x128xf32>
    %c3 = arith.constant 3 : index
    %c0_19 = arith.constant 0 : index
    %c0_20 = arith.constant 0 : index
    %36 = vector.load %arg1[%c3, %c0_19, %c0_20] : memref<4x16x128xbf16, #tpu.memory_space<vmem>>, vector<1x16x128xbf16>
    %37 = vector.shape_cast %36 : vector<1x16x128xbf16> to vector<16x128xbf16>
    %cst_21 = arith.constant dense<0.000000e+00> : vector<16x128xf32>
    %38 = tpu.matmul %37, %3, %cst_21 {dimension_numbers = #tpu.dot_dimension_numbers<[1], [0], [0], [1], [0, 0, 1, 1], [], []>} : vector<16x128xbf16>, vector<128x128xbf16>, vector<16x128xf32> -> vector<16x128xf32>
    %cst_22 = arith.constant dense<0.000000e+00> : vector<128xf32>
    %39 = vector.multi_reduction <add>, %38, %cst_22 [0] : vector<16x128xf32> to vector<128xf32>
    %40 = vector.shape_cast %39 : vector<128xf32> to vector<1x128xf32>
    %41 = arith.addf %31, %40 : vector<1x128xf32>
    %42 = arith.mulf %38, %38 : vector<16x128xf32>
    %cst_23 = arith.constant dense<0.000000e+00> : vector<128xf32>
    %43 = vector.multi_reduction <add>, %42, %cst_23 [0] : vector<16x128xf32> to vector<128xf32>
    %44 = vector.shape_cast %43 : vector<128xf32> to vector<1x128xf32>
    %45 = arith.addf %35, %44 : vector<1x128xf32>
    %c0_24 = arith.constant 0 : index
    %c0_25 = arith.constant 0 : index
    %46 = vector.load %arg3[%c0_24, %c0_25] : memref<1x128xf32, #tpu.memory_space<vmem>>, vector<1x128xf32>
    %47 = arith.addf %46, %41 : vector<1x128xf32>
    %c0_26 = arith.constant 0 : index
    %c0_27 = arith.constant 0 : index
    %48 = vector.load %arg3[%c0_26, %c0_27] : memref<1x128xf32, #tpu.memory_space<vmem>>, vector<1x128xf32>
    tpu.vector_store %arg3[%c0_26, %c0_27], %47 {strides = array<i32>} : memref<1x128xf32, #tpu.memory_space<vmem>>, vector<1x128xf32>,
    %c0_28 = arith.constant 0 : index
    %c0_29 = arith.constant 0 : index
    %49 = vector.load %arg4[%c0_28, %c0_29] : memref<1x128xf32, #tpu.memory_space<vmem>>, vector<1x128xf32>
    %50 = arith.addf %49, %45 : vector<1x128xf32>
    %c0_30 = arith.constant 0 : index
    %c0_31 = arith.constant 0 : index
    %51 = vector.load %arg4[%c0_30, %c0_31] : memref<1x128xf32, #tpu.memory_space<vmem>>, vector<1x128xf32>
    tpu.vector_store %arg4[%c0_30, %c0_31], %50 {strides = array<i32>} : memref<1x128xf32, #tpu.memory_space<vmem>>, vector<1x128xf32>,
    return
  }
  func.func @transform_0(%arg0: i32) -> (i32, i32, i32) {
    %c0_i32 = arith.constant 0 : i32
    %c0_i32_0 = arith.constant 0 : i32
    %c0_i32_1 = arith.constant 0 : i32
    return %c0_i32, %arg0, %c0_i32_0 : i32, i32, i32
  }
  func.func @transform_1(%arg0: i32) -> (i32, i32) {
    %c0_i32 = arith.constant 0 : i32
    %c0_i32_0 = arith.constant 0 : i32
    %c0_i32_1 = arith.constant 0 : i32
    return %c0_i32, %c0_i32_0 : i32, i32
  }
  func.func @transform_2(%arg0: i32) -> (i32, i32) {
    %c0_i32 = arith.constant 0 : i32
    %c0_i32_0 = arith.constant 0 : i32
    %c0_i32_1 = arith.constant 0 : i32
    return %c0_i32, %c0_i32_0 : i32, i32
  }
  func.func @transform_3(%arg0: i32) -> (i32, i32) {
    %c0_i32 = arith.constant 0 : i32
    %c0_i32_0 = arith.constant 0 : i32
    %c0_i32_1 = arith.constant 0 : i32
    return %c0_i32, %c0_i32_0 : i32, i32
  }
}

module attributes {stable_mosaic.version = 11 : i64} {
  func.func @_bn_lif_kernel(%arg0: i32, %arg1: memref<4x16x128xbf16, #tpu.memory_space<vmem>>, %arg2: memref<128x128xbf16, #tpu.memory_space<vmem>>, %arg3: memref<1x128xf32, #tpu.memory_space<vmem>>, %arg4: memref<1x128xf32, #tpu.memory_space<vmem>>, %arg5: memref<4x16x128xbf16, #tpu.memory_space<vmem>>) attributes {dimension_semantics = [#tpu.dimension_semantics<parallel>], iteration_bounds = array<i64: 1>, scalar_prefetch = 0 : i64, scratch_operands = 0 : i64, tpu.core_type = #tpu.core_type<tc>, window_params = [{transform_indices = @transform_0, window_bounds = array<i64: 4, 16, 128>}, {pipeline_mode = #tpu.pipeline_mode<synchronous>, transform_indices = @transform_1, window_bounds = array<i64: 128, 128>}, {pipeline_mode = #tpu.pipeline_mode<synchronous>, transform_indices = @transform_2, window_bounds = array<i64: 1, 128>}, {pipeline_mode = #tpu.pipeline_mode<synchronous>, transform_indices = @transform_3, window_bounds = array<i64: 1, 128>}, {transform_indices = @transform_4, window_bounds = array<i64: 4, 16, 128>}]} {
    %c0 = arith.constant 0 : index
    %c0_0 = arith.constant 0 : index
    %0 = vector.load %arg2[%c0, %c0_0] : memref<128x128xbf16, #tpu.memory_space<vmem>>, vector<128x128xbf16>
    %c0_1 = arith.constant 0 : index
    %c0_2 = arith.constant 0 : index
    %1 = vector.load %arg3[%c0_1, %c0_2] : memref<1x128xf32, #tpu.memory_space<vmem>>, vector<1x128xf32>
    %c0_3 = arith.constant 0 : index
    %c0_4 = arith.constant 0 : index
    %2 = vector.load %arg4[%c0_3, %c0_4] : memref<1x128xf32, #tpu.memory_space<vmem>>, vector<1x128xf32>
    %cst = arith.constant 0.000000e+00 : f32
    %3 = vector.broadcast %cst : f32 to vector<16x128xf32>
    %c0_5 = arith.constant 0 : index
    %c0_6 = arith.constant 0 : index
    %c0_7 = arith.constant 0 : index
    %4 = vector.load %arg1[%c0_5, %c0_6, %c0_7] : memref<4x16x128xbf16, #tpu.memory_space<vmem>>, vector<1x16x128xbf16>
    %5 = vector.shape_cast %4 : vector<1x16x128xbf16> to vector<16x128xbf16>
    %cst_8 = arith.constant dense<0.000000e+00> : vector<16x128xf32>
    %6 = tpu.matmul %5, %0, %cst_8 {dimension_numbers = #tpu.dot_dimension_numbers<[1], [0], [0], [1], [0, 0, 1, 1], [], []>} : vector<16x128xbf16>, vector<128x128xbf16>, vector<16x128xf32> -> vector<16x128xf32>
    %7 = vector.broadcast %1 : vector<1x128xf32> to vector<16x128xf32>
    %8 = arith.mulf %6, %7 : vector<16x128xf32>
    %9 = vector.broadcast %2 : vector<1x128xf32> to vector<16x128xf32>
    %10 = arith.addf %8, %9 : vector<16x128xf32>
    %11 = arith.subf %10, %3 : vector<16x128xf32>
    %cst_9 = arith.constant 5.000000e-01 : f32
    %12 = vector.broadcast %cst_9 : f32 to vector<16x128xf32>
    %13 = arith.mulf %11, %12 : vector<16x128xf32>
    %14 = arith.addf %3, %13 : vector<16x128xf32>
    %cst_10 = arith.constant 5.000000e-01 : f32
    %15 = vector.broadcast %cst_10 : f32 to vector<16x128xf32>
    %16 = arith.cmpf oge, %14, %15 : vector<16x128xf32>
    %17 = arith.extui %16 : vector<16x128xi1> to vector<16x128xi32>
    %18 = arith.sitofp %17 : vector<16x128xi32> to vector<16x128xf32>
    %19 = arith.truncf %18 : vector<16x128xf32> to vector<16x128xbf16>
    %c0_11 = arith.constant 0 : index
    %c0_12 = arith.constant 0 : index
    %c0_13 = arith.constant 0 : index
    %20 = vector.load %arg5[%c0_11, %c0_12, %c0_13] : memref<4x16x128xbf16, #tpu.memory_space<vmem>>, vector<1x16x128xbf16>
    %21 = vector.shape_cast %20 : vector<1x16x128xbf16> to vector<16x128xbf16>
    %22 = vector.shape_cast %19 : vector<16x128xbf16> to vector<1x16x128xbf16>
    tpu.vector_store %arg5[%c0_11, %c0_12, %c0_13], %22 {strides = array<i32>} : memref<4x16x128xbf16, #tpu.memory_space<vmem>>, vector<1x16x128xbf16>,
    %cst_14 = arith.constant 1.000000e+00 : f32
    %23 = vector.broadcast %cst_14 : f32 to vector<16x128xf32>
    %24 = arith.subf %23, %18 : vector<16x128xf32>
    %25 = arith.mulf %14, %24 : vector<16x128xf32>
    %c1 = arith.constant 1 : index
    %c0_15 = arith.constant 0 : index
    %c0_16 = arith.constant 0 : index
    %26 = vector.load %arg1[%c1, %c0_15, %c0_16] : memref<4x16x128xbf16, #tpu.memory_space<vmem>>, vector<1x16x128xbf16>
    %27 = vector.shape_cast %26 : vector<1x16x128xbf16> to vector<16x128xbf16>
    %cst_17 = arith.constant dense<0.000000e+00> : vector<16x128xf32>
    %28 = tpu.matmul %27, %0, %cst_17 {dimension_numbers = #tpu.dot_dimension_numbers<[1], [0], [0], [1], [0, 0, 1, 1], [], []>} : vector<16x128xbf16>, vector<128x128xbf16>, vector<16x128xf32> -> vector<16x128xf32>
    %29 = vector.broadcast %1 : vector<1x128xf32> to vector<16x128xf32>
    %30 = arith.mulf %28, %29 : vector<16x128xf32>
    %31 = vector.broadcast %2 : vector<1x128xf32> to vector<16x128xf32>
    %32 = arith.addf %30, %31 : vector<16x128xf32>
    %33 = arith.subf %32, %25 : vector<16x128xf32>
    %cst_18 = arith.constant 5.000000e-01 : f32
    %34 = vector.broadcast %cst_18 : f32 to vector<16x128xf32>
    %35 = arith.mulf %33, %34 : vector<16x128xf32>
    %36 = arith.addf %25, %35 : vector<16x128xf32>
    %cst_19 = arith.constant 5.000000e-01 : f32
    %37 = vector.broadcast %cst_19 : f32 to vector<16x128xf32>
    %38 = arith.cmpf oge, %36, %37 : vector<16x128xf32>
    %39 = arith.extui %38 : vector<16x128xi1> to vector<16x128xi32>
    %40 = arith.sitofp %39 : vector<16x128xi32> to vector<16x128xf32>
    %41 = arith.truncf %40 : vector<16x128xf32> to vector<16x128xbf16>
    %c1_20 = arith.constant 1 : index
    %c0_21 = arith.constant 0 : index
    %c0_22 = arith.constant 0 : index
    %42 = vector.load %arg5[%c1_20, %c0_21, %c0_22] : memref<4x16x128xbf16, #tpu.memory_space<vmem>>, vector<1x16x128xbf16>
    %43 = vector.shape_cast %42 : vector<1x16x128xbf16> to vector<16x128xbf16>
    %44 = vector.shape_cast %41 : vector<16x128xbf16> to vector<1x16x128xbf16>
    tpu.vector_store %arg5[%c1_20, %c0_21, %c0_22], %44 {strides = array<i32>} : memref<4x16x128xbf16, #tpu.memory_space<vmem>>, vector<1x16x128xbf16>,
    %cst_23 = arith.constant 1.000000e+00 : f32
    %45 = vector.broadcast %cst_23 : f32 to vector<16x128xf32>
    %46 = arith.subf %45, %40 : vector<16x128xf32>
    %47 = arith.mulf %36, %46 : vector<16x128xf32>
    %c2 = arith.constant 2 : index
    %c0_24 = arith.constant 0 : index
    %c0_25 = arith.constant 0 : index
    %48 = vector.load %arg1[%c2, %c0_24, %c0_25] : memref<4x16x128xbf16, #tpu.memory_space<vmem>>, vector<1x16x128xbf16>
    %49 = vector.shape_cast %48 : vector<1x16x128xbf16> to vector<16x128xbf16>
    %cst_26 = arith.constant dense<0.000000e+00> : vector<16x128xf32>
    %50 = tpu.matmul %49, %0, %cst_26 {dimension_numbers = #tpu.dot_dimension_numbers<[1], [0], [0], [1], [0, 0, 1, 1], [], []>} : vector<16x128xbf16>, vector<128x128xbf16>, vector<16x128xf32> -> vector<16x128xf32>
    %51 = vector.broadcast %1 : vector<1x128xf32> to vector<16x128xf32>
    %52 = arith.mulf %50, %51 : vector<16x128xf32>
    %53 = vector.broadcast %2 : vector<1x128xf32> to vector<16x128xf32>
    %54 = arith.addf %52, %53 : vector<16x128xf32>
    %55 = arith.subf %54, %47 : vector<16x128xf32>
    %cst_27 = arith.constant 5.000000e-01 : f32
    %56 = vector.broadcast %cst_27 : f32 to vector<16x128xf32>
    %57 = arith.mulf %55, %56 : vector<16x128xf32>
    %58 = arith.addf %47, %57 : vector<16x128xf32>
    %cst_28 = arith.constant 5.000000e-01 : f32
    %59 = vector.broadcast %cst_28 : f32 to vector<16x128xf32>
    %60 = arith.cmpf oge, %58, %59 : vector<16x128xf32>
    %61 = arith.extui %60 : vector<16x128xi1> to vector<16x128xi32>
    %62 = arith.sitofp %61 : vector<16x128xi32> to vector<16x128xf32>
    %63 = arith.truncf %62 : vector<16x128xf32> to vector<16x128xbf16>
    %c2_29 = arith.constant 2 : index
    %c0_30 = arith.constant 0 : index
    %c0_31 = arith.constant 0 : index
    %64 = vector.load %arg5[%c2_29, %c0_30, %c0_31] : memref<4x16x128xbf16, #tpu.memory_space<vmem>>, vector<1x16x128xbf16>
    %65 = vector.shape_cast %64 : vector<1x16x128xbf16> to vector<16x128xbf16>
    %66 = vector.shape_cast %63 : vector<16x128xbf16> to vector<1x16x128xbf16>
    tpu.vector_store %arg5[%c2_29, %c0_30, %c0_31], %66 {strides = array<i32>} : memref<4x16x128xbf16, #tpu.memory_space<vmem>>, vector<1x16x128xbf16>,
    %cst_32 = arith.constant 1.000000e+00 : f32
    %67 = vector.broadcast %cst_32 : f32 to vector<16x128xf32>
    %68 = arith.subf %67, %62 : vector<16x128xf32>
    %69 = arith.mulf %58, %68 : vector<16x128xf32>
    %c3 = arith.constant 3 : index
    %c0_33 = arith.constant 0 : index
    %c0_34 = arith.constant 0 : index
    %70 = vector.load %arg1[%c3, %c0_33, %c0_34] : memref<4x16x128xbf16, #tpu.memory_space<vmem>>, vector<1x16x128xbf16>
    %71 = vector.shape_cast %70 : vector<1x16x128xbf16> to vector<16x128xbf16>
    %cst_35 = arith.constant dense<0.000000e+00> : vector<16x128xf32>
    %72 = tpu.matmul %71, %0, %cst_35 {dimension_numbers = #tpu.dot_dimension_numbers<[1], [0], [0], [1], [0, 0, 1, 1], [], []>} : vector<16x128xbf16>, vector<128x128xbf16>, vector<16x128xf32> -> vector<16x128xf32>
    %73 = vector.broadcast %1 : vector<1x128xf32> to vector<16x128xf32>
    %74 = arith.mulf %72, %73 : vector<16x128xf32>
    %75 = vector.broadcast %2 : vector<1x128xf32> to vector<16x128xf32>
    %76 = arith.addf %74, %75 : vector<16x128xf32>
    %77 = arith.subf %76, %69 : vector<16x128xf32>
    %cst_36 = arith.constant 5.000000e-01 : f32
    %78 = vector.broadcast %cst_36 : f32 to vector<16x128xf32>
    %79 = arith.mulf %77, %78 : vector<16x128xf32>
    %80 = arith.addf %69, %79 : vector<16x128xf32>
    %cst_37 = arith.constant 5.000000e-01 : f32
    %81 = vector.broadcast %cst_37 : f32 to vector<16x128xf32>
    %82 = arith.cmpf oge, %80, %81 : vector<16x128xf32>
    %83 = arith.extui %82 : vector<16x128xi1> to vector<16x128xi32>
    %84 = arith.sitofp %83 : vector<16x128xi32> to vector<16x128xf32>
    %85 = arith.truncf %84 : vector<16x128xf32> to vector<16x128xbf16>
    %c3_38 = arith.constant 3 : index
    %c0_39 = arith.constant 0 : index
    %c0_40 = arith.constant 0 : index
    %86 = vector.load %arg5[%c3_38, %c0_39, %c0_40] : memref<4x16x128xbf16, #tpu.memory_space<vmem>>, vector<1x16x128xbf16>
    %87 = vector.shape_cast %86 : vector<1x16x128xbf16> to vector<16x128xbf16>
    %88 = vector.shape_cast %85 : vector<16x128xbf16> to vector<1x16x128xbf16>
    tpu.vector_store %arg5[%c3_38, %c0_39, %c0_40], %88 {strides = array<i32>} : memref<4x16x128xbf16, #tpu.memory_space<vmem>>, vector<1x16x128xbf16>,
    return
  }
  func.func @transform_0(%arg0: i32) -> (i32, i32, i32) {
    %c0_i32 = arith.constant 0 : i32
    %c0_i32_0 = arith.constant 0 : i32
    %c0_i32_1 = arith.constant 0 : i32
    return %c0_i32, %arg0, %c0_i32_0 : i32, i32, i32
  }
  func.func @transform_1(%arg0: i32) -> (i32, i32) {
    %c0_i32 = arith.constant 0 : i32
    %c0_i32_0 = arith.constant 0 : i32
    %c0_i32_1 = arith.constant 0 : i32
    return %c0_i32, %c0_i32_0 : i32, i32
  }
  func.func @transform_2(%arg0: i32) -> (i32, i32) {
    %c0_i32 = arith.constant 0 : i32
    %c0_i32_0 = arith.constant 0 : i32
    %c0_i32_1 = arith.constant 0 : i32
    return %c0_i32, %c0_i32_0 : i32, i32
  }
  func.func @transform_3(%arg0: i32) -> (i32, i32) {
    %c0_i32 = arith.constant 0 : i32
    %c0_i32_0 = arith.constant 0 : i32
    %c0_i32_1 = arith.constant 0 : i32
    return %c0_i32, %c0_i32_0 : i32, i32
  }
  func.func @transform_4(%arg0: i32) -> (i32, i32, i32) {
    %c0_i32 = arith.constant 0 : i32
    %c0_i32_0 = arith.constant 0 : i32
    %c0_i32_1 = arith.constant 0 : i32
    return %c0_i32, %arg0, %c0_i32_0 : i32, i32, i32
  }
}

</mosaic_0001>

<llo_original>
// kernel: spik_linear_layer.3
$region0: #{spik_linear_layer.3}
  #allocation0 [shape = 'u32[]', space=smem, size = 0x4, offset = 0x4, fixed_abs, tag = 'smem constant byte address 0x4 - core index']
  #allocation1 [shape = 'u32[144,128]{1,0:T(1,128)}', space=vmem, size = 0x12000, scoped, tag = 'internal scratch']
  %s0 = inlined_call_operand.vmem [shape: bf16[4,16,128], index: 0, kind: input, shape index: {}]
  %s1 = inlined_call_operand.vmem [shape: bf16[128,128], index: 1, kind: input, shape index: {}]
  %s2 = inlined_call_operand.vmem [shape: f32[1,128], index: 2, kind: input, shape index: {}]
  %s3 = inlined_call_operand.vmem [shape: f32[1,128], index: 3, kind: input, shape index: {}]
  %s4 = inlined_call_operand.vmem [shape: bf16[4,16,128], index: 4, kind: output, shape index: {}]
  %s5 = sld [smem:[#allocation0]]
  $region26: #{spik_linear_layer.3} parent=0
    _
  %s7 = ssub.s32 1, %s5
  %s8 = scalar_select 0, %s7, %s5
  // Predicated region
  $region2: #{spik_linear_layer.3} parent=0 // pred_check
    _
  $region3: #{spik_linear_layer.3} parent=0 // pred_check_branch
    %10 = sbr.rel (0) target = $region5
  $region4: #{spik_linear_layer.3} parent=0 // pred_region
    _
  $region5: #{spik_linear_layer.3} parent=0 // pred_fallthru
    _
  // Predicated region
  $region6: #{spik_linear_layer.3} parent=0 // pred_check
    _
  $region7: #{spik_linear_layer.3} parent=0 // pred_check_branch
    %12 = sbr.rel (0) target = $region9
  $region8: #{spik_linear_layer.3} parent=0 // pred_region
    _
  $region9: #{spik_linear_layer.3} parent=0 // pred_fallthru
    _
  // Predicated region
  $region10: #{spik_linear_layer.3} parent=0 // pred_check
    _
  $region11: #{spik_linear_layer.3} parent=0 // pred_check_branch
    %14 = sbr.rel (0) target = $region13
  $region12: #{spik_linear_layer.3} parent=0 // pred_region
    _
  $region13: #{spik_linear_layer.3} parent=0 // pred_fallthru
    _
  // Predicated region
  $region14: #{spik_linear_layer.3} parent=0 // pred_check
    _
  $region15: #{spik_linear_layer.3} parent=0 // pred_check_branch
    %16 = sbr.rel (0) target = $region17
  $region16: #{spik_linear_layer.3} parent=0 // pred_region
    _
  $region17: #{spik_linear_layer.3} parent=0 // pred_fallthru
    _
  %v18 = vld [vmem:[%s1] sm:$0xf]
  %v19 = vld [vmem:[%s1 + $0x4] sm:$0xf]
  %v20 = vld [vmem:[%s1 + $0x8] sm:$0xf]
  %v21 = vld [vmem:[%s1 + $0xc] sm:$0xf]
  %v22 = vld [vmem:[%s1 + $0x10] sm:$0xf]
  %v23 = vld [vmem:[%s1 + $0x14] sm:$0xf]
  %v24 = vld [vmem:[%s1 + $0x18] sm:$0xf]
  %v25 = vld [vmem:[%s1 + $0x1c] sm:$0xf]
  %v26 = vld [vmem:[%s1 + $0x20] sm:$0xf]
  %v27 = vld [vmem:[%s1 + $0x24] sm:$0xf]
  %v28 = vld [vmem:[%s1 + $0x28] sm:$0xf]
  %v29 = vld [vmem:[%s1 + $0x2c] sm:$0xf]
  %v30 = vld [vmem:[%s1 + $0x30] sm:$0xf]
  %v31 = vld [vmem:[%s1 + $0x34] sm:$0xf]
  %v32 = vld [vmem:[%s1 + $0x38] sm:$0xf]
  %v33 = vld [vmem:[%s1 + $0x3c] sm:$0xf]
  %v34 = vld [vmem:[%s2] sm:$0x1]
  %v35 = vld [vmem:[%s3] sm:$0x1]
  %v36 = vld [vmem:[%s0] sm:$0xf]
  %v37 = vld [vmem:[%s0 + $0x4] sm:$0xf]
  %v40 = vunpack.c.l.b16 %v36
  %v41 = vunpack.c.l.b16 %v37
  %v42 = vpack.c.b16 %v41, %v40
  %v60 = vunpack.c.l.b16 %v18
  %v61 = vunpack.c.l.b16 %v19
  %v62 = vunpack.c.l.b16 %v20
  %v63 = vunpack.c.l.b16 %v21
  %v64 = vunpack.c.l.b16 %v22
  %v65 = vunpack.c.l.b16 %v23
  %v66 = vunpack.c.l.b16 %v24
  %v67 = vunpack.c.l.b16 %v25
  %v68 = vunpack.c.l.b16 %v26
  %v69 = vunpack.c.l.b16 %v27
  %v70 = vunpack.c.l.b16 %v28
  %v71 = vunpack.c.l.b16 %v29
  %v72 = vunpack.c.l.b16 %v30
  %v73 = vunpack.c.l.b16 %v31
  %v74 = vunpack.c.l.b16 %v32
  %v75 = vunpack.c.l.b16 %v33
  %v76 = vpack.c.b16 %v61, %v60
  %v77 = vpack.c.b16 %v63, %v62
  %v78 = vpack.c.b16 %v65, %v64
  %v79 = vpack.c.b16 %v67, %v66
  %v80 = vpack.c.b16 %v69, %v68
  %v81 = vpack.c.b16 %v71, %v70
  %v82 = vpack.c.b16 %v73, %v72
  %v83 = vpack.c.b16 %v75, %v74
  %92 = vmatprep.subr.bf16.mxu0 0
  %93 = vmatpush1.bf16.msra.mxu0 %v83
  %94 = vmatprep.subr.bf16.mxu0 0
  %95 = vmatpush1.bf16.msra.mxu0 %v82
  %96 = vmatprep.subr.bf16.mxu0 0
  %97 = vmatpush1.bf16.msra.mxu0 %v81
  %98 = vmatprep.subr.bf16.mxu0 0
  %99 = vmatpush1.bf16.msra.mxu0 %v80
  %100 = vmatprep.subr.bf16.mxu0 0
  %101 = vmatpush1.bf16.msra.mxu0 %v79
  %102 = vmatprep.subr.bf16.mxu0 0
  %103 = vmatpush1.bf16.msra.mxu0 %v78
  %104 = vmatprep.subr.bf16.mxu0 0
  %105 = vmatpush1.bf16.msra.mxu0 %v77
  %106 = vmatprep.subr.bf16.mxu0 0
  %107 = vmatpush1.bf16.msra.mxu0 %v76
  %108 = vmatprep.subr.bf16.mxu0 0
  %109 = vmatpush2.bf16.msra.mxu0 0
  %110 = vmatprep.subr.bf16.mxu0 0
  %111 = vmatpush2.bf16.msra.mxu0 0
  %112 = vmatprep.subr.bf16.mxu0 0
  %113 = vmatpush2.bf16.msra.mxu0 0
  %114 = vmatprep.subr.bf16.mxu0 0
  %115 = vmatpush2.bf16.msra.mxu0 0
  %116 = vmatprep.subr.bf16.mxu0 0
  %117 = vmatpush2.bf16.msra.mxu0 0
  %118 = vmatprep.subr.bf16.mxu0 0
  %119 = vmatpush2.bf16.msra.mxu0 0
  %120 = vmatprep.subr.bf16.mxu0 0
  %121 = vmatpush2.bf16.msra.mxu0 0
  %122 = vmatprep.subr.bf16.mxu0 0
  %123 = vmatpush2.bf16.msra.mxu0 0
  %124 = vmatprep.mubr.bf16.mxu0 0
  %125 = vmatmul.mubr.bf16.gmra.mxu0 %v42
  %v126 = vpop.f32.mrf.mxu0
  %v127 = vadd.f32 0.0, %v126
  %v128 = vpop.f32.mrf.mxu0
  %v129 = vpop.f32.mrf.mxu0
  %v130 = vadd.f32 0.0, %v129
  %v131 = vpop.f32.mrf.mxu0
  %132 = vdwg.mxu0
  %v134 = vlaneseq
  %v135 = vshrl.u32 %v134, 7
  %v136 = vsub.s32 0, %v135
  %v137 = vrot.slane %v34, %v136
  %v139 = vmul.f32 %v127, %v137
  %v140 = vmul.f32 %v130, %v137
  %v142 = vlaneseq
  %v143 = vshrl.u32 %v142, 7
  %v144 = vsub.s32 0, %v143
  %v145 = vrot.slane %v35, %v144
  %v147 = vadd.f32 %v139, %v145
  %v148 = vadd.f32 %v140, %v145
  %v149 = vmul.f32 %v147, 0.5
  %v150 = vmul.f32 %v148, 0.5
  %v151 = vadd.f32 %v149, 0.0
  %v152 = vadd.f32 %v150, 0.0
  %vm153 = vcmp.ge.f32.partialorder %v151, 0.5
  %vm154 = vcmp.ge.f32.partialorder %v152, 0.5
  %v155 = vsel %vm153, 1, 0
  %v156 = vsel %vm154, 1, 0
  %v157 = vcvt.s32.f32 %v155
  %v158 = vcvt.s32.f32 %v156
  %v159 = vpack.c.bf16 %v158, %v157
  %v161 = vunpack.c.l.b16 %v159
  %v162 = vunpack.c.h.b16 %v159
  %v163 = vpack.c.b16 %v161, %v161
  %v164 = vpack.c.b16 %v162, %v162
  %167 = vst [vmem:[%s4] sm:$0xf] %v163
  %168 = vst [vmem:[%s4 + $0x4] sm:$0xf] %v164
  %v169 = vsub.f32 1.0, %v157
  %v170 = vsub.f32 1.0, %v158
  %v171 = vmul.f32 %v151, %v169
  %v172 = vmul.f32 %v152, %v170
  %s173 = scalar_lea.vmem %s0, 8
  %v174 = vld [vmem:[%s173] sm:$0xf]
  %v175 = vld [vmem:[%s173 + $0x4] sm:$0xf]
  %v178 = vunpack.c.l.b16 %v174
  %v179 = vunpack.c.l.b16 %v175
  %v180 = vpack.c.b16 %v179, %v178
  %182 = vmatprep.subr.bf16.mxu0 0
  %183 = vmatpush1.bf16.msra.mxu0 %v83
  %184 = vmatprep.subr.bf16.mxu0 0
  %185 = vmatpush1.bf16.msra.mxu0 %v82
  %186 = vmatprep.subr.bf16.mxu0 0
  %187 = vmatpush1.bf16.msra.mxu0 %v81
  %188 = vmatprep.subr.bf16.mxu0 0
  %189 = vmatpush1.bf16.msra.mxu0 %v80
  %190 = vmatprep.subr.bf16.mxu0 0
  %191 = vmatpush1.bf16.msra.mxu0 %v79
  %192 = vmatprep.subr.bf16.mxu0 0
  %193 = vmatpush1.bf16.msra.mxu0 %v78
  %194 = vmatprep.subr.bf16.mxu0 0
  %195 = vmatpush1.bf16.msra.mxu0 %v77
  %196 = vmatprep.subr.bf16.mxu0 0
  %197 = vmatpush1.bf16.msra.mxu0 %v76
  %198 = vmatprep.subr.bf16.mxu0 0
  %199 = vmatpush2.bf16.msra.mxu0 0
  %200 = vmatprep.subr.bf16.mxu0 0
  %201 = vmatpush2.bf16.msra.mxu0 0
  %202 = vmatprep.subr.bf16.mxu0 0
  %203 = vmatpush2.bf16.msra.mxu0 0
  %204 = vmatprep.subr.bf16.mxu0 0
  %205 = vmatpush2.bf16.msra.mxu0 0
  %206 = vmatprep.subr.bf16.mxu0 0
  %207 = vmatpush2.bf16.msra.mxu0 0
  %208 = vmatprep.subr.bf16.mxu0 0
  %209 = vmatpush2.bf16.msra.mxu0 0
  %210 = vmatprep.subr.bf16.mxu0 0
  %211 = vmatpush2.bf16.msra.mxu0 0
  %212 = vmatprep.subr.bf16.mxu0 0
  %213 = vmatpush2.bf16.msra.mxu0 0
  %214 = vmatprep.mubr.bf16.mxu0 0
  %215 = vmatmul.mubr.bf16.gmra.mxu0 %v180
  %v216 = vpop.f32.mrf.mxu0
  %v217 = vadd.f32 0.0, %v216
  %v218 = vpop.f32.mrf.mxu0
  %v219 = vpop.f32.mrf.mxu0
  %v220 = vadd.f32 0.0, %v219
  %v221 = vpop.f32.mrf.mxu0
  %222 = vdwg.mxu0
  %v223 = vmul.f32 %v217, %v137
  %v224 = vmul.f32 %v220, %v137
  %v225 = vadd.f32 %v223, %v145
  %v226 = vadd.f32 %v224, %v145
  %v227 = vsub.f32 %v225, %v171
  %v228 = vsub.f32 %v226, %v172
  %v229 = vmul.f32 %v227, 0.5
  %v230 = vmul.f32 %v228, 0.5
  %v231 = vadd.f32 %v171, %v229
  %v232 = vadd.f32 %v172, %v230
  %vm233 = vcmp.ge.f32.partialorder %v231, 0.5
  %vm234 = vcmp.ge.f32.partialorder %v232, 0.5
  %v235 = vsel %vm233, 1, 0
  %v236 = vsel %vm234, 1, 0
  %v237 = vcvt.s32.f32 %v235
  %v238 = vcvt.s32.f32 %v236
  %v239 = vpack.c.bf16 %v238, %v237
  %v241 = vunpack.c.l.b16 %v239
  %v242 = vunpack.c.h.b16 %v239
  %v243 = vpack.c.b16 %v241, %v241
  %v244 = vpack.c.b16 %v242, %v242
  %s247 = scalar_lea.vmem %s4, 8
  %248 = vst [vmem:[%s247] sm:$0xf] %v243
  %249 = vst [vmem:[%s247 + $0x4] sm:$0xf] %v244
  %v250 = vsub.f32 1.0, %v237
  %v251 = vsub.f32 1.0, %v238
  %v252 = vmul.f32 %v231, %v250
  %v253 = vmul.f32 %v232, %v251
  %s254 = scalar_lea.vmem %s0, 16
  %v255 = vld [vmem:[%s254] sm:$0xf]
  %v256 = vld [vmem:[%s254 + $0x4] sm:$0xf]
  %v259 = vunpack.c.l.b16 %v255
  %v260 = vunpack.c.l.b16 %v256
  %v261 = vpack.c.b16 %v260, %v259
  %263 = vmatprep.subr.bf16.mxu0 0
  %264 = vmatpush1.bf16.msra.mxu0 %v83
  %265 = vmatprep.subr.bf16.mxu0 0
  %266 = vmatpush1.bf16.msra.mxu0 %v82
  %267 = vmatprep.subr.bf16.mxu0 0
  %268 = vmatpush1.bf16.msra.mxu0 %v81
  %269 = vmatprep.subr.bf16.mxu0 0
  %270 = vmatpush1.bf16.msra.mxu0 %v80
  %271 = vmatprep.subr.bf16.mxu0 0
  %272 = vmatpush1.bf16.msra.mxu0 %v79
  %273 = vmatprep.subr.bf16.mxu0 0
  %274 = vmatpush1.bf16.msra.mxu0 %v78
  %275 = vmatprep.subr.bf16.mxu0 0
  %276 = vmatpush1.bf16.msra.mxu0 %v77
  %277 = vmatprep.subr.bf16.mxu0 0
  %278 = vmatpush1.bf16.msra.mxu0 %v76
  %279 = vmatprep.subr.bf16.mxu0 0
  %280 = vmatpush2.bf16.msra.mxu0 0
  %281 = vmatprep.subr.bf16.mxu0 0
  %282 = vmatpush2.bf16.msra.mxu0 0
  %283 = vmatprep.subr.bf16.mxu0 0
  %284 = vmatpush2.bf16.msra.mxu0 0
  %285 = vmatprep.subr.bf16.mxu0 0
  %286 = vmatpush2.bf16.msra.mxu0 0
  %287 = vmatprep.subr.bf16.mxu0 0
  %288 = vmatpush2.bf16.msra.mxu0 0
  %289 = vmatprep.subr.bf16.mxu0 0
  %290 = vmatpush2.bf16.msra.mxu0 0
  %291 = vmatprep.subr.bf16.mxu0 0
  %292 = vmatpush2.bf16.msra.mxu0 0
  %293 = vmatprep.subr.bf16.mxu0 0
  %294 = vmatpush2.bf16.msra.mxu0 0
  %295 = vmatprep.mubr.bf16.mxu0 0
  %296 = vmatmul.mubr.bf16.gmra.mxu0 %v261
  %v297 = vpop.f32.mrf.mxu0
  %v298 = vadd.f32 0.0, %v297
  %v299 = vpop.f32.mrf.mxu0
  %v300 = vpop.f32.mrf.mxu0
  %v301 = vadd.f32 0.0, %v300
  %v302 = vpop.f32.mrf.mxu0
  %303 = vdwg.mxu0
  %v304 = vmul.f32 %v298, %v137
  %v305 = vmul.f32 %v301, %v137
  %v306 = vadd.f32 %v304, %v145
  %v307 = vadd.f32 %v305, %v145
  %v308 = vsub.f32 %v306, %v252
  %v309 = vsub.f32 %v307, %v253
  %v310 = vmul.f32 %v308, 0.5
  %v311 = vmul.f32 %v309, 0.5
  %v312 = vadd.f32 %v252, %v310
  %v313 = vadd.f32 %v253, %v311
  %vm314 = vcmp.ge.f32.partialorder %v312, 0.5
  %vm315 = vcmp.ge.f32.partialorder %v313, 0.5
  %v316 = vsel %vm314, 1, 0
  %v317 = vsel %vm315, 1, 0
  %v318 = vcvt.s32.f32 %v316
  %v319 = vcvt.s32.f32 %v317
  %v320 = vpack.c.bf16 %v319, %v318
  %v322 = vunpack.c.l.b16 %v320
  %v323 = vunpack.c.h.b16 %v320
  %v324 = vpack.c.b16 %v322, %v322
  %v325 = vpack.c.b16 %v323, %v323
  %s328 = scalar_lea.vmem %s4, 16
  %329 = vst [vmem:[%s328] sm:$0xf] %v324
  %330 = vst [vmem:[%s328 + $0x4] sm:$0xf] %v325
  %v331 = vsub.f32 1.0, %v318
  %v332 = vsub.f32 1.0, %v319
  %v333 = vmul.f32 %v312, %v331
  %v334 = vmul.f32 %v313, %v332
  %s335 = scalar_lea.vmem %s0, 24
  %v336 = vld [vmem:[%s335] sm:$0xf]
  %v337 = vld [vmem:[%s335 + $0x4] sm:$0xf]
  %v340 = vunpack.c.l.b16 %v336
  %v341 = vunpack.c.l.b16 %v337
  %v342 = vpack.c.b16 %v341, %v340
  %344 = vmatprep.subr.bf16.mxu0 0
  %345 = vmatpush1.bf16.msra.mxu0 %v83
  %346 = vmatprep.subr.bf16.mxu0 0
  %347 = vmatpush1.bf16.msra.mxu0 %v82
  %348 = vmatprep.subr.bf16.mxu0 0
  %349 = vmatpush1.bf16.msra.mxu0 %v81
  %350 = vmatprep.subr.bf16.mxu0 0
  %351 = vmatpush1.bf16.msra.mxu0 %v80
  %352 = vmatprep.subr.bf16.mxu0 0
  %353 = vmatpush1.bf16.msra.mxu0 %v79
  %354 = vmatprep.subr.bf16.mxu0 0
  %355 = vmatpush1.bf16.msra.mxu0 %v78
  %356 = vmatprep.subr.bf16.mxu0 0
  %357 = vmatpush1.bf16.msra.mxu0 %v77
  %358 = vmatprep.subr.bf16.mxu0 0
  %359 = vmatpush1.bf16.msra.mxu0 %v76
  %360 = vmatprep.subr.bf16.mxu0 0
  %361 = vmatpush2.bf16.msra.mxu0 0
  %362 = vmatprep.subr.bf16.mxu0 0
  %363 = vmatpush2.bf16.msra.mxu0 0
  %364 = vmatprep.subr.bf16.mxu0 0
  %365 = vmatpush2.bf16.msra.mxu0 0
  %366 = vmatprep.subr.bf16.mxu0 0
  %367 = vmatpush2.bf16.msra.mxu0 0
  %368 = vmatprep.subr.bf16.mxu0 0
  %369 = vmatpush2.bf16.msra.mxu0 0
  %370 = vmatprep.subr.bf16.mxu0 0
  %371 = vmatpush2.bf16.msra.mxu0 0
  %372 = vmatprep.subr.bf16.mxu0 0
  %373 = vmatpush2.bf16.msra.mxu0 0
  %374 = vmatprep.subr.bf16.mxu0 0
  %375 = vmatpush2.bf16.msra.mxu0 0
  %376 = vmatprep.mubr.bf16.mxu0 0
  %377 = vmatmul.mubr.bf16.gmra.mxu0 %v342
  %v378 = vpop.f32.mrf.mxu0
  %v379 = vadd.f32 0.0, %v378
  %v380 = vpop.f32.mrf.mxu0
  %v381 = vpop.f32.mrf.mxu0
  %v382 = vadd.f32 0.0, %v381
  %v383 = vpop.f32.mrf.mxu0
  %384 = vdwg.mxu0
  %v385 = vmul.f32 %v379, %v137
  %v386 = vmul.f32 %v382, %v137
  %v387 = vadd.f32 %v385, %v145
  %v388 = vadd.f32 %v386, %v145
  %v389 = vsub.f32 %v387, %v333
  %v390 = vsub.f32 %v388, %v334
  %v391 = vmul.f32 %v389, 0.5
  %v392 = vmul.f32 %v390, 0.5
  %v393 = vadd.f32 %v333, %v391
  %v394 = vadd.f32 %v334, %v392
  %vm395 = vcmp.ge.f32.partialorder %v393, 0.5
  %vm396 = vcmp.ge.f32.partialorder %v394, 0.5
  %v397 = vsel %vm395, 1, 0
  %v398 = vsel %vm396, 1, 0
  %v399 = vcvt.s32.f32 %v397
  %v400 = vcvt.s32.f32 %v398
  %v401 = vpack.c.bf16 %v400, %v399
  %v403 = vunpack.c.l.b16 %v401
  %v404 = vunpack.c.h.b16 %v401
  %v405 = vpack.c.b16 %v403, %v403
  %v406 = vpack.c.b16 %v404, %v404
  %s409 = scalar_lea.vmem %s4, 24
  %410 = vst [vmem:[%s409] sm:$0xf] %v405
  %411 = vst [vmem:[%s409 + $0x4] sm:$0xf] %v406
  // Predicated region
  $region18: #{spik_linear_layer.3} parent=0 // pred_check
    _
  $region19: #{spik_linear_layer.3} parent=0 // pred_check_branch
    %413 = sbr.rel (0) target = $region21
  $region20: #{spik_linear_layer.3} parent=0 // pred_region
    _
  $region21: #{spik_linear_layer.3} parent=0 // pred_fallthru
    _
  // Predicated region
  $region22: #{spik_linear_layer.3} parent=0 // pred_check
    _
  $region23: #{spik_linear_layer.3} parent=0 // pred_check_branch
    %415 = sbr.rel (0) target = $region25
  $region24: #{spik_linear_layer.3} parent=0 // pred_region
    _
  $region25: #{spik_linear_layer.3} parent=0 // pred_fallthru
    _

// kernel: spik_linear_layer.2
$region0: #{spik_linear_layer.2}
  #allocation0 [shape = 'u32[]', space=smem, size = 0x4, offset = 0x4, fixed_abs, tag = 'smem constant byte address 0x4 - core index']
  #allocation1 [shape = 'u32[144,128]{1,0:T(1,128)}', space=vmem, size = 0x12000, scoped, tag = 'internal scratch']
  %s0 = inlined_call_operand.vmem [shape: bf16[4,16,128], index: 0, kind: input, shape index: {}]
  %s1 = inlined_call_operand.vmem [shape: bf16[128,128], index: 1, kind: input, shape index: {}]
  %s2 = inlined_call_operand.vmem [shape: f32[1,128], index: 2, kind: output, shape index: {0}]
  %s3 = inlined_call_operand.vmem [shape: f32[1,128], index: 3, kind: output, shape index: {1}]
  %4 = xla_tuple %s2, %s3
  %s5 = sld [smem:[#allocation0]]
  $region30: #{spik_linear_layer.2} parent=0
    _
  %s7 = ssub.s32 1, %s5
  %s8 = scalar_select 0, %s7, %s5
  // Predicated region
  $region2: #{spik_linear_layer.2} parent=0 // pred_check
    _
  $region3: #{spik_linear_layer.2} parent=0 // pred_check_branch
    %10 = sbr.rel (0) target = $region5
  $region4: #{spik_linear_layer.2} parent=0 // pred_region
    _
  $region5: #{spik_linear_layer.2} parent=0 // pred_fallthru
    _
  // Predicated region
  $region6: #{spik_linear_layer.2} parent=0 // pred_check
    _
  $region7: #{spik_linear_layer.2} parent=0 // pred_check_branch
    %12 = sbr.rel (0) target = $region9
  $region8: #{spik_linear_layer.2} parent=0 // pred_region
    _
  $region9: #{spik_linear_layer.2} parent=0 // pred_fallthru
    _
  %p14 = scmp.eq.s32.totalorder 0, 0
  // Predicated region
  $region10: #{spik_linear_layer.2} parent=0 // pred_check
    %p15 = pneg %p14
  $region11: #{spik_linear_layer.2} parent=0 // pred_check_branch
    %17 = sbr.rel (%p15) target = $region13
  $region12: #{spik_linear_layer.2} parent=0 // pred_region
    %18 = vst [vmem:[%s2] sm:$0x1] 0.0
    %19 = vst [vmem:[%s3] sm:$0x1] 0.0
  $region13: #{spik_linear_layer.2} parent=0 // pred_fallthru
    _
  %v20 = vld [vmem:[%s1] sm:$0xf]
  %v21 = vld [vmem:[%s1 + $0x4] sm:$0xf]
  %v22 = vld [vmem:[%s1 + $0x8] sm:$0xf]
  %v23 = vld [vmem:[%s1 + $0xc] sm:$0xf]
  %v24 = vld [vmem:[%s1 + $0x10] sm:$0xf]
  %v25 = vld [vmem:[%s1 + $0x14] sm:$0xf]
  %v26 = vld [vmem:[%s1 + $0x18] sm:$0xf]
  %v27 = vld [vmem:[%s1 + $0x1c] sm:$0xf]
  %v28 = vld [vmem:[%s1 + $0x20] sm:$0xf]
  %v29 = vld [vmem:[%s1 + $0x24] sm:$0xf]
  %v30 = vld [vmem:[%s1 + $0x28] sm:$0xf]
  %v31 = vld [vmem:[%s1 + $0x2c] sm:$0xf]
  %v32 = vld [vmem:[%s1 + $0x30] sm:$0xf]
  %v33 = vld [vmem:[%s1 + $0x34] sm:$0xf]
  %v34 = vld [vmem:[%s1 + $0x38] sm:$0xf]
  %v35 = vld [vmem:[%s1 + $0x3c] sm:$0xf]
  %v36 = vld [vmem:[%s0] sm:$0xf]
  %v37 = vld [vmem:[%s0 + $0x4] sm:$0xf]
  %v40 = vunpack.c.l.b16 %v36
  %v41 = vunpack.c.l.b16 %v37
  %v42 = vpack.c.b16 %v41, %v40
  %v60 = vunpack.c.l.b16 %v20
  %v61 = vunpack.c.l.b16 %v21
  %v62 = vunpack.c.l.b16 %v22
  %v63 = vunpack.c.l.b16 %v23
  %v64 = vunpack.c.l.b16 %v24
  %v65 = vunpack.c.l.b16 %v25
  %v66 = vunpack.c.l.b16 %v26
  %v67 = vunpack.c.l.b16 %v27
  %v68 = vunpack.c.l.b16 %v28
  %v69 = vunpack.c.l.b16 %v29
  %v70 = vunpack.c.l.b16 %v30
  %v71 = vunpack.c.l.b16 %v31
  %v72 = vunpack.c.l.b16 %v32
  %v73 = vunpack.c.l.b16 %v33
  %v74 = vunpack.c.l.b16 %v34
  %v75 = vunpack.c.l.b16 %v35
  %v76 = vpack.c.b16 %v61, %v60
  %v77 = vpack.c.b16 %v63, %v62
  %v78 = vpack.c.b16 %v65, %v64
  %v79 = vpack.c.b16 %v67, %v66
  %v80 = vpack.c.b16 %v69, %v68
  %v81 = vpack.c.b16 %v71, %v70
  %v82 = vpack.c.b16 %v73, %v72
  %v83 = vpack.c.b16 %v75, %v74
  %92 = vmatprep.subr.bf16.mxu0 0
  %93 = vmatpush1.bf16.msra.mxu0 %v83
  %94 = vmatprep.subr.bf16.mxu0 0
  %95 = vmatpush1.bf16.msra.mxu0 %v82
  %96 = vmatprep.subr.bf16.mxu0 0
  %97 = vmatpush1.bf16.msra.mxu0 %v81
  %98 = vmatprep.subr.bf16.mxu0 0
  %99 = vmatpush1.bf16.msra.mxu0 %v80
  %100 = vmatprep.subr.bf16.mxu0 0
  %101 = vmatpush1.bf16.msra.mxu0 %v79
  %102 = vmatprep.subr.bf16.mxu0 0
  %103 = vmatpush1.bf16.msra.mxu0 %v78
  %104 = vmatprep.subr.bf16.mxu0 0
  %105 = vmatpush1.bf16.msra.mxu0 %v77
  %106 = vmatprep.subr.bf16.mxu0 0
  %107 = vmatpush1.bf16.msra.mxu0 %v76
  %108 = vmatprep.subr.bf16.mxu0 0
  %109 = vmatpush2.bf16.msra.mxu0 0
  %110 = vmatprep.subr.bf16.mxu0 0
  %111 = vmatpush2.bf16.msra.mxu0 0
  %112 = vmatprep.subr.bf16.mxu0 0
  %113 = vmatpush2.bf16.msra.mxu0 0
  %114 = vmatprep.subr.bf16.mxu0 0
  %115 = vmatpush2.bf16.msra.mxu0 0
  %116 = vmatprep.subr.bf16.mxu0 0
  %117 = vmatpush2.bf16.msra.mxu0 0
  %118 = vmatprep.subr.bf16.mxu0 0
  %119 = vmatpush2.bf16.msra.mxu0 0
  %120 = vmatprep.subr.bf16.mxu0 0
  %121 = vmatpush2.bf16.msra.mxu0 0
  %122 = vmatprep.subr.bf16.mxu0 0
  %123 = vmatpush2.bf16.msra.mxu0 0
  %124 = vmatprep.mubr.bf16.mxu0 0
  %125 = vmatmul.mubr.bf16.gmra.mxu0 %v42
  %v126 = vpop.f32.mrf.mxu0
  %v127 = vadd.f32 0.0, %v126
  %v128 = vpop.f32.mrf.mxu0
  %v129 = vpop.f32.mrf.mxu0
  %v130 = vadd.f32 0.0, %v129
  %v131 = vpop.f32.mrf.mxu0
  %132 = vdwg.mxu0
  %v133 = vadd.f32 %v127, %v130
  %v134 = vrot.slane %v133, 4
  %v135 = vadd.f32 %v133, %v134
  %v136 = vrot.slane %v135, 2
  %v137 = vadd.f32 %v135, %v136
  %v138 = vrot.slane %v137, 1
  %v139 = vadd.f32 %v137, %v138
  %v140 = vadd.f32 %v139, 0.0
  %v141 = vmul.f32 %v127, %v127
  %v142 = vmul.f32 %v130, %v130
  %v143 = vadd.f32 %v141, %v142
  %v144 = vrot.slane %v143, 4
  %v145 = vadd.f32 %v143, %v144
  %v146 = vrot.slane %v145, 2
  %v147 = vadd.f32 %v145, %v146
  %v148 = vrot.slane %v147, 1
  %v149 = vadd.f32 %v147, %v148
  %v150 = vadd.f32 %v149, 0.0
  %s151 = scalar_lea.vmem %s0, 8
  %v152 = vld [vmem:[%s151] sm:$0xf]
  %v153 = vld [vmem:[%s151 + $0x4] sm:$0xf]
  %v156 = vunpack.c.l.b16 %v152
  %v157 = vunpack.c.l.b16 %v153
  %v158 = vpack.c.b16 %v157, %v156
  %160 = vmatprep.subr.bf16.mxu0 0
  %161 = vmatpush1.bf16.msra.mxu0 %v83
  %162 = vmatprep.subr.bf16.mxu0 0
  %163 = vmatpush1.bf16.msra.mxu0 %v82
  %164 = vmatprep.subr.bf16.mxu0 0
  %165 = vmatpush1.bf16.msra.mxu0 %v81
  %166 = vmatprep.subr.bf16.mxu0 0
  %167 = vmatpush1.bf16.msra.mxu0 %v80
  %168 = vmatprep.subr.bf16.mxu0 0
  %169 = vmatpush1.bf16.msra.mxu0 %v79
  %170 = vmatprep.subr.bf16.mxu0 0
  %171 = vmatpush1.bf16.msra.mxu0 %v78
  %172 = vmatprep.subr.bf16.mxu0 0
  %173 = vmatpush1.bf16.msra.mxu0 %v77
  %174 = vmatprep.subr.bf16.mxu0 0
  %175 = vmatpush1.bf16.msra.mxu0 %v76
  %176 = vmatprep.subr.bf16.mxu0 0
  %177 = vmatpush2.bf16.msra.mxu0 0
  %178 = vmatprep.subr.bf16.mxu0 0
  %179 = vmatpush2.bf16.msra.mxu0 0
  %180 = vmatprep.subr.bf16.mxu0 0
  %181 = vmatpush2.bf16.msra.mxu0 0
  %182 = vmatprep.subr.bf16.mxu0 0
  %183 = vmatpush2.bf16.msra.mxu0 0
  %184 = vmatprep.subr.bf16.mxu0 0
  %185 = vmatpush2.bf16.msra.mxu0 0
  %186 = vmatprep.subr.bf16.mxu0 0
  %187 = vmatpush2.bf16.msra.mxu0 0
  %188 = vmatprep.subr.bf16.mxu0 0
  %189 = vmatpush2.bf16.msra.mxu0 0
  %190 = vmatprep.subr.bf16.mxu0 0
  %191 = vmatpush2.bf16.msra.mxu0 0
  %192 = vmatprep.mubr.bf16.mxu0 0
  %193 = vmatmul.mubr.bf16.gmra.mxu0 %v158
  %v194 = vpop.f32.mrf.mxu0
  %v195 = vadd.f32 0.0, %v194
  %v196 = vpop.f32.mrf.mxu0
  %v197 = vpop.f32.mrf.mxu0
  %v198 = vadd.f32 0.0, %v197
  %v199 = vpop.f32.mrf.mxu0
  %200 = vdwg.mxu0
  %v201 = vadd.f32 %v195, %v198
  %v202 = vrot.slane %v201, 4
  %v203 = vadd.f32 %v201, %v202
  %v204 = vrot.slane %v203, 2
  %v205 = vadd.f32 %v203, %v204
  %v206 = vrot.slane %v205, 1
  %v207 = vadd.f32 %v205, %v206
  %v208 = vadd.f32 %v140, %v207
  %v209 = vmul.f32 %v195, %v195
  %v210 = vmul.f32 %v198, %v198
  %v211 = vadd.f32 %v209, %v210
  %v212 = vrot.slane %v211, 4
  %v213 = vadd.f32 %v211, %v212
  %v214 = vrot.slane %v213, 2
  %v215 = vadd.f32 %v213, %v214
  %v216 = vrot.slane %v215, 1
  %v217 = vadd.f32 %v215, %v216
  %v218 = vadd.f32 %v150, %v217
  %s219 = scalar_lea.vmem %s0, 16
  %v220 = vld [vmem:[%s219] sm:$0xf]
  %v221 = vld [vmem:[%s219 + $0x4] sm:$0xf]
  %v224 = vunpack.c.l.b16 %v220
  %v225 = vunpack.c.l.b16 %v221
  %v226 = vpack.c.b16 %v225, %v224
  %228 = vmatprep.subr.bf16.mxu0 0
  %229 = vmatpush1.bf16.msra.mxu0 %v83
  %230 = vmatprep.subr.bf16.mxu0 0
  %231 = vmatpush1.bf16.msra.mxu0 %v82
  %232 = vmatprep.subr.bf16.mxu0 0
  %233 = vmatpush1.bf16.msra.mxu0 %v81
  %234 = vmatprep.subr.bf16.mxu0 0
  %235 = vmatpush1.bf16.msra.mxu0 %v80
  %236 = vmatprep.subr.bf16.mxu0 0
  %237 = vmatpush1.bf16.msra.mxu0 %v79
  %238 = vmatprep.subr.bf16.mxu0 0
  %239 = vmatpush1.bf16.msra.mxu0 %v78
  %240 = vmatprep.subr.bf16.mxu0 0
  %241 = vmatpush1.bf16.msra.mxu0 %v77
  %242 = vmatprep.subr.bf16.mxu0 0
  %243 = vmatpush1.bf16.msra.mxu0 %v76
  %244 = vmatprep.subr.bf16.mxu0 0
  %245 = vmatpush2.bf16.msra.mxu0 0
  %246 = vmatprep.subr.bf16.mxu0 0
  %247 = vmatpush2.bf16.msra.mxu0 0
  %248 = vmatprep.subr.bf16.mxu0 0
  %249 = vmatpush2.bf16.msra.mxu0 0
  %250 = vmatprep.subr.bf16.mxu0 0
  %251 = vmatpush2.bf16.msra.mxu0 0
  %252 = vmatprep.subr.bf16.mxu0 0
  %253 = vmatpush2.bf16.msra.mxu0 0
  %254 = vmatprep.subr.bf16.mxu0 0
  %255 = vmatpush2.bf16.msra.mxu0 0
  %256 = vmatprep.subr.bf16.mxu0 0
  %257 = vmatpush2.bf16.msra.mxu0 0
  %258 = vmatprep.subr.bf16.mxu0 0
  %259 = vmatpush2.bf16.msra.mxu0 0
  %260 = vmatprep.mubr.bf16.mxu0 0
  %261 = vmatmul.mubr.bf16.gmra.mxu0 %v226
  %v262 = vpop.f32.mrf.mxu0
  %v263 = vadd.f32 0.0, %v262
  %v264 = vpop.f32.mrf.mxu0
  %v265 = vpop.f32.mrf.mxu0
  %v266 = vadd.f32 0.0, %v265
  %v267 = vpop.f32.mrf.mxu0
  %268 = vdwg.mxu0
  %v269 = vadd.f32 %v263, %v266
  %v270 = vrot.slane %v269, 4
  %v271 = vadd.f32 %v269, %v270
  %v272 = vrot.slane %v271, 2
  %v273 = vadd.f32 %v271, %v272
  %v274 = vrot.slane %v273, 1
  %v275 = vadd.f32 %v273, %v274
  %v276 = vadd.f32 %v208, %v275
  %v277 = vmul.f32 %v263, %v263
  %v278 = vmul.f32 %v266, %v266
  %v279 = vadd.f32 %v277, %v278
  %v280 = vrot.slane %v279, 4
  %v281 = vadd.f32 %v279, %v280
  %v282 = vrot.slane %v281, 2
  %v283 = vadd.f32 %v281, %v282
  %v284 = vrot.slane %v283, 1
  %v285 = vadd.f32 %v283, %v284
  %v286 = vadd.f32 %v218, %v285
  %s287 = scalar_lea.vmem %s0, 24
  %v288 = vld [vmem:[%s287] sm:$0xf]
  %v289 = vld [vmem:[%s287 + $0x4] sm:$0xf]
  %v292 = vunpack.c.l.b16 %v288
  %v293 = vunpack.c.l.b16 %v289
  %v294 = vpack.c.b16 %v293, %v292
  %296 = vmatprep.subr.bf16.mxu0 0
  %297 = vmatpush1.bf16.msra.mxu0 %v83
  %298 = vmatprep.subr.bf16.mxu0 0
  %299 = vmatpush1.bf16.msra.mxu0 %v82
  %300 = vmatprep.subr.bf16.mxu0 0
  %301 = vmatpush1.bf16.msra.mxu0 %v81
  %302 = vmatprep.subr.bf16.mxu0 0
  %303 = vmatpush1.bf16.msra.mxu0 %v80
  %304 = vmatprep.subr.bf16.mxu0 0
  %305 = vmatpush1.bf16.msra.mxu0 %v79
  %306 = vmatprep.subr.bf16.mxu0 0
  %307 = vmatpush1.bf16.msra.mxu0 %v78
  %308 = vmatprep.subr.bf16.mxu0 0
  %309 = vmatpush1.bf16.msra.mxu0 %v77
  %310 = vmatprep.subr.bf16.mxu0 0
  %311 = vmatpush1.bf16.msra.mxu0 %v76
  %312 = vmatprep.subr.bf16.mxu0 0
  %313 = vmatpush2.bf16.msra.mxu0 0
  %314 = vmatprep.subr.bf16.mxu0 0
  %315 = vmatpush2.bf16.msra.mxu0 0
  %316 = vmatprep.subr.bf16.mxu0 0
  %317 = vmatpush2.bf16.msra.mxu0 0
  %318 = vmatprep.subr.bf16.mxu0 0
  %319 = vmatpush2.bf16.msra.mxu0 0
  %320 = vmatprep.subr.bf16.mxu0 0
  %321 = vmatpush2.bf16.msra.mxu0 0
  %322 = vmatprep.subr.bf16.mxu0 0
  %323 = vmatpush2.bf16.msra.mxu0 0
  %324 = vmatprep.subr.bf16.mxu0 0
  %325 = vmatpush2.bf16.msra.mxu0 0
  %326 = vmatprep.subr.bf16.mxu0 0
  %327 = vmatpush2.bf16.msra.mxu0 0
  %328 = vmatprep.mubr.bf16.mxu0 0
  %329 = vmatmul.mubr.bf16.gmra.mxu0 %v294
  %v330 = vpop.f32.mrf.mxu0
  %v331 = vadd.f32 0.0, %v330
  %v332 = vpop.f32.mrf.mxu0
  %v333 = vpop.f32.mrf.mxu0
  %v334 = vadd.f32 0.0, %v333
  %v335 = vpop.f32.mrf.mxu0
  %336 = vdwg.mxu0
  %v337 = vadd.f32 %v331, %v334
  %v338 = vrot.slane %v337, 4
  %v339 = vadd.f32 %v337, %v338
  %v340 = vrot.slane %v339, 2
  %v341 = vadd.f32 %v339, %v340
  %v342 = vrot.slane %v341, 1
  %v343 = vadd.f32 %v341, %v342
  %v344 = vadd.f32 %v276, %v343
  %v345 = vmul.f32 %v331, %v331
  %v346 = vmul.f32 %v334, %v334
  %v347 = vadd.f32 %v345, %v346
  %v348 = vrot.slane %v347, 4
  %v349 = vadd.f32 %v347, %v348
  %v350 = vrot.slane %v349, 2
  %v351 = vadd.f32 %v349, %v350
  %v352 = vrot.slane %v351, 1
  %v353 = vadd.f32 %v351, %v352
  %v354 = vadd.f32 %v286, %v353
  %v355 = vld [vmem:[%s2] sm:$0x1]
  %v356 = vadd.f32 %v355, %v344
  %357 = vst [vmem:[%s2] sm:$0x1] %v356
  %v358 = vld [vmem:[%s3] sm:$0x1]
  %v359 = vadd.f32 %v358, %v354
  %360 = vst [vmem:[%s3] sm:$0x1] %v359
  // Predicated region
  $region14: #{spik_linear_layer.2} parent=0 // pred_check
    _
  $region15: #{spik_linear_layer.2} parent=0 // pred_check_branch
    %362 = sbr.rel (0) target = $region17
  $region16: #{spik_linear_layer.2} parent=0 // pred_region
    _
  $region17: #{spik_linear_layer.2} parent=0 // pred_fallthru
    _
  // Predicated region
  $region18: #{spik_linear_layer.2} parent=0 // pred_check
    _
  $region19: #{spik_linear_layer.2} parent=0 // pred_check_branch
    %364 = sbr.rel (0) target = $region21
  $region20: #{spik_linear_layer.2} parent=0 // pred_region
    _
  $region21: #{spik_linear_layer.2} parent=0 // pred_fallthru
    _
  // Predicated region
  $region22: #{spik_linear_layer.2} parent=0 // pred_check
    _
  $region23: #{spik_linear_layer.2} parent=0 // pred_check_branch
    %366 = sbr.rel (0) target = $region25
  $region24: #{spik_linear_layer.2} parent=0 // pred_region
    _
  $region25: #{spik_linear_layer.2} parent=0 // pred_fallthru
    _
  // Predicated region
  $region26: #{spik_linear_layer.2} parent=0 // pred_check
    _
  $region27: #{spik_linear_layer.2} parent=0 // pred_check_branch
    %368 = sbr.rel (0) target = $region29
  $region28: #{spik_linear_layer.2} parent=0 // pred_region
    _
  $region29: #{spik_linear_layer.2} parent=0 // pred_fallthru
    _

</llo_original>
